<compile_context>
chip_gen: v7x
topology: tpu7x:2x2x1
jax: 0.10.0
libtpu: 0.0.40
codegen_flags: <defaults>
</compile_context>

<pallas_src>
import functools
import math

import jax
import jax.numpy as jnp
from jax.experimental import pallas as pl
from jax.experimental.pallas import tpu as pltpu

DROPOUT_P = 0.1


def _sdpa_flash_kernel(x_ref, y_ref, z_ref, mask_ref, o_ref,
                       m_sc, l_sc, acc_sc, *, scale):
    """One (batch, S-block, L-block) step of flash-style attention.

    x_ref:    (Sb, D)    query tile
    y_ref:    (Lb, D)    key tile
    z_ref:    (Lb, Dv)   value tile
    mask_ref: (Sb, Lb)   dropout mask, already scaled to {0, 1/(1-p)}
    o_ref:    (Sb, Dv)   output tile (written on last L-block)
    m_sc, l_sc: (Sb, 1)  running max / running sum (f32 scratch)
    acc_sc:   (Sb, Dv)   running output accumulator (f32 scratch)
    """
    li = pl.program_id(2)

    @pl.when(li == 0)
    def _init():
        m_sc[...] = jnp.full(m_sc.shape, -jnp.inf, m_sc.dtype)
        l_sc[...] = jnp.zeros(l_sc.shape, l_sc.dtype)
        acc_sc[...] = jnp.zeros(acc_sc.shape, acc_sc.dtype)

    # Fold the 1/inv_scale_factor into the (Sb, D) operand (cheaper than
    # scaling the (Sb, Lb) score matrix whenever L > D).
    x = x_ref[...]
    xs = x * jnp.asarray(scale, x.dtype)

    # scores = x @ y^T without materializing a transpose: contract the last
    # dim of both operands.  f32 accumulation on the MXU.
    s = jax.lax.dot_general(
        xs, y_ref[...],
        dimension_numbers=(((1,), (1,)), ((), ())),
        preferred_element_type=jnp.float32,
    )  # (Sb, Lb), f32

    # Online softmax update.
    m_prev = m_sc[...]
    m_new = jnp.maximum(m_prev, jnp.max(s, axis=-1, keepdims=True))
    alpha = jnp.exp(m_prev - m_new)
    e = jnp.exp(s - m_new)                                   # (Sb, Lb) f32

    # Softmax denominator uses the *un-dropped* probabilities (dropout is
    # applied after softmax in the reference module).
    l_sc[...] = alpha * l_sc[...] + jnp.sum(e, axis=-1, keepdims=True)

    # Dropout: mask already carries the 1/(1-p) rescale -> single multiply.
    e_drop = e * mask_ref[...]

    acc_sc[...] = alpha * acc_sc[...] + jax.lax.dot_general(
        e_drop.astype(z_ref.dtype), z_ref[...],
        dimension_numbers=(((1,), (0,)), ((), ())),
        preferred_element_type=jnp.float32,
    )
    m_sc[...] = m_new

    @pl.when(li == pl.num_programs(2) - 1)
    def _finalize():
        o_ref[...] = (acc_sc[...] / l_sc[...]).astype(o_ref.dtype)


def sdpa_pallas(x, y, z, *, dropout_p=DROPOUT_P, rng_key=None,
                inv_scale_factor=None, block_s=256, block_l=256):
    """d = dropout(softmax((x @ y^T) / inv_scale_factor, -1), p) @ z."""
    B, S, D = x.shape
    By, L, Dy = y.shape
    Bz, Lz, Dv = z.shape
    assert B == By == Bz and D == Dy and L == Lz

    if inv_scale_factor is None:
        inv_scale_factor = math.sqrt(D)
    scale = 1.0 / float(inv_scale_factor)

    Sb = min(block_s, S)
    Lb = min(block_l, L)
    assert S % Sb == 0 and L % Lb == 0, "S/L must be divisible by the tile sizes"

    # Inverted-dropout mask, pre-scaled to {0, 1/(1-p)} (f32 so the masked
    # probabilities stay in f32 until the second matmul).
    if dropout_p > 0.0:
        assert rng_key is not None, "dropout needs an rng key"
        keep = jax.random.bernoulli(rng_key, 1.0 - dropout_p, (B, S, L))
        mask = keep.astype(jnp.float32) * jnp.float32(1.0 / (1.0 - dropout_p))
    else:
        mask = jnp.ones((B, S, L), jnp.float32)

    kernel = functools.partial(_sdpa_flash_kernel, scale=scale)

    return pl.pallas_call(
        kernel,
        out_shape=jax.ShapeDtypeStruct((B, S, Dv), x.dtype),
        grid_spec=pltpu.PrefetchScalarGridSpec(
            num_scalar_prefetch=0,
            grid=(B, S // Sb, L // Lb),
            in_specs=[
                pl.BlockSpec((pl.Squeezed(), Sb, D), lambda b, si, li: (b, si, 0)),
                pl.BlockSpec((pl.Squeezed(), Lb, D), lambda b, si, li: (b, li, 0)),
                pl.BlockSpec((pl.Squeezed(), Lb, Dv), lambda b, si, li: (b, li, 0)),
                pl.BlockSpec((pl.Squeezed(), Sb, Lb), lambda b, si, li: (b, si, li)),
            ],
            out_specs=pl.BlockSpec((pl.Squeezed(), Sb, Dv),
                                   lambda b, si, li: (b, si, 0)),
            scratch_shapes=[
                pltpu.VMEM((Sb, 1), jnp.float32),   # running max m
                pltpu.VMEM((Sb, 1), jnp.float32),   # running sum l
                pltpu.VMEM((Sb, Dv), jnp.float32),  # output accumulator
            ],
        ),
        compiler_params=pltpu.CompilerParams(
            # batch and S-block axes are independent -> shard across both
            # v7x TensorCores; the L (reduction) axis must stay sequential.
            dimension_semantics=("parallel", "parallel", "arbitrary"),
        ),
    )(x, y, z, mask)


def sdpa_reference_nodrop(x, y, z):
    D = x.shape[-1]
    a = jnp.einsum("bsd,bld->bsl", x, y)
    b = a / math.sqrt(D)
    c = jax.nn.softmax(b, axis=-1)
    return jnp.einsum("bsl,bld->bsd", c, z)


if __name__ == "__main__":
    B, S, L, D, Dv = 2, 8, 8, 32, 32
    key = jax.random.PRNGKey(0)
    kx, ky, kz, kd = jax.random.split(key, 4)
    x = jax.random.normal(kx, (B, S, D), dtype=jnp.float32)
    y = jax.random.normal(ky, (B, L, D), dtype=jnp.float32)
    z = jax.random.normal(kz, (B, L, Dv), dtype=jnp.float32)

    # Correctness check against a pure-JAX reference with dropout disabled.
    out_nodrop = jax.block_until_ready(sdpa_pallas(x, y, z, dropout_p=0.0))
    ref = sdpa_reference_nodrop(x, y, z)
    assert jnp.allclose(out_nodrop, ref, atol=1e-4, rtol=1e-4), "mismatch vs reference"

    # Full forward with dropout enabled (training mode, as in the PyTorch module).
    out = jax.block_until_ready(
        sdpa_pallas(x, y, z, dropout_p=DROPOUT_P, rng_key=kd))
    assert out.shape == (B, S, Dv)
    assert bool(jnp.all(jnp.isfinite(out)))

    print("KERNEL_OK")
</pallas_src>

<mosaic_0001>
module attributes {stable_mosaic.version = 11 : i64} {
  func.func @_sdpa_flash_kernel(%arg0: i32, %arg1: i32, %arg2: i32, %arg3: memref<1x8x32xf32, #tpu.memory_space<vmem>>, %arg4: memref<1x8x32xf32, #tpu.memory_space<vmem>>, %arg5: memref<1x8x32xf32, #tpu.memory_space<vmem>>, %arg6: memref<1x8x8xf32, #tpu.memory_space<vmem>>, %arg7: memref<1x8x32xf32, #tpu.memory_space<vmem>>, %arg8: memref<8x1xf32, #tpu.memory_space<vmem>>, %arg9: memref<8x1xf32, #tpu.memory_space<vmem>>, %arg10: memref<8x32xf32, #tpu.memory_space<vmem>>) attributes {dimension_semantics = [#tpu.dimension_semantics<parallel>, #tpu.dimension_semantics<parallel>, #tpu.dimension_semantics<arbitrary>], iteration_bounds = array<i64: 2, 1, 1>, scalar_prefetch = 0 : i64, scratch_operands = 3 : i64, tpu.core_type = #tpu.core_type<tc>, window_params = [{transform_indices = @transform_0, window_bounds = array<i64: 1, 8, 32>}, {transform_indices = @transform_1, window_bounds = array<i64: 1, 8, 32>}, {transform_indices = @transform_2, window_bounds = array<i64: 1, 8, 32>}, {transform_indices = @transform_3, window_bounds = array<i64: 1, 8, 8>}, {transform_indices = @transform_4, window_bounds = array<i64: 1, 8, 32>}]} {
    %c0_i32 = arith.constant 0 : i32
    %0 = arith.cmpi eq, %arg2, %c0_i32 : i32
    %1 = arith.extui %0 : i1 to i32
    %c0_i32_0 = arith.constant 0 : i32
    %2 = arith.cmpi ne, %1, %c0_i32_0 : i32
    scf.if %2 {
      %cst_30 = arith.constant 0xFF800000 : f32
      %40 = vector.broadcast %cst_30 : f32 to vector<8x1xf32>
      %c0_31 = arith.constant 0 : index
      %c0_32 = arith.constant 0 : index
      %41 = vector.load %arg8[%c0_31, %c0_32] : memref<8x1xf32, #tpu.memory_space<vmem>>, vector<8x1xf32>
      tpu.vector_store %arg8[%c0_31, %c0_32], %40 {strides = array<i32>} : memref<8x1xf32, #tpu.memory_space<vmem>>, vector<8x1xf32>,
      %cst_33 = arith.constant 0.000000e+00 : f32
      %42 = vector.broadcast %cst_33 : f32 to vector<8x1xf32>
      %c0_34 = arith.constant 0 : index
      %c0_35 = arith.constant 0 : index
      %43 = vector.load %arg9[%c0_34, %c0_35] : memref<8x1xf32, #tpu.memory_space<vmem>>, vector<8x1xf32>
      tpu.vector_store %arg9[%c0_34, %c0_35], %42 {strides = array<i32>} : memref<8x1xf32, #tpu.memory_space<vmem>>, vector<8x1xf32>,
      %cst_36 = arith.constant 0.000000e+00 : f32
      %44 = vector.broadcast %cst_36 : f32 to vector<8x32xf32>
      %c0_37 = arith.constant 0 : index
      %c0_38 = arith.constant 0 : index
      %45 = vector.load %arg10[%c0_37, %c0_38] : memref<8x32xf32, #tpu.memory_space<vmem>>, vector<8x32xf32>
      tpu.vector_store %arg10[%c0_37, %c0_38], %44 {strides = array<i32>} : memref<8x32xf32, #tpu.memory_space<vmem>>, vector<8x32xf32>,
    } else {
    }
    %c0 = arith.constant 0 : index
    %c0_1 = arith.constant 0 : index
    %c0_2 = arith.constant 0 : index
    %3 = vector.load %arg3[%c0, %c0_1, %c0_2] : memref<1x8x32xf32, #tpu.memory_space<vmem>>, vector<1x8x32xf32>
    %4 = vector.shape_cast %3 : vector<1x8x32xf32> to vector<8x32xf32>
    %cst = arith.constant 0.176776692 : f32
    %5 = vector.broadcast %cst : f32 to vector<8x32xf32>
    %6 = arith.mulf %4, %5 : vector<8x32xf32>
    %c0_3 = arith.constant 0 : index
    %c0_4 = arith.constant 0 : index
    %c0_5 = arith.constant 0 : index
    %7 = vector.load %arg4[%c0_3, %c0_4, %c0_5] : memref<1x8x32xf32, #tpu.memory_space<vmem>>, vector<1x8x32xf32>
    %8 = vector.shape_cast %7 : vector<1x8x32xf32> to vector<8x32xf32>
    %cst_6 = arith.constant dense<0.000000e+00> : vector<8x8xf32>
    %9 = tpu.matmul %6, %8, %cst_6 {dimension_numbers = #tpu.dot_dimension_numbers<[1], [1], [0], [0], [0, 0, 1, 0], [], []>} : vector<8x32xf32>, vector<8x32xf32>, vector<8x8xf32> -> vector<8x8xf32>
    %c0_7 = arith.constant 0 : index
    %c0_8 = arith.constant 0 : index
    %10 = vector.load %arg8[%c0_7, %c0_8] : memref<8x1xf32, #tpu.memory_space<vmem>>, vector<8x1xf32>
    %cst_9 = arith.constant dense<0xFF800000> : vector<8xf32>
    %11 = vector.multi_reduction <maximumf>, %9, %cst_9 [1] : vector<8x8xf32> to vector<8xf32>
    %12 = vector.shape_cast %11 : vector<8xf32> to vector<8x1xf32>
    %13 = arith.maximumf %10, %12 : vector<8x1xf32>
    %14 = arith.subf %10, %13 : vector<8x1xf32>
    %15 = math.exp %14 : vector<8x1xf32>
    %16 = vector.broadcast %13 : vector<8x1xf32> to vector<8x8xf32>
    %17 = arith.subf %9, %16 : vector<8x8xf32>
    %18 = math.exp %17 : vector<8x8xf32>
    %c0_10 = arith.constant 0 : index
    %c0_11 = arith.constant 0 : index
    %19 = vector.load %arg9[%c0_10, %c0_11] : memref<8x1xf32, #tpu.memory_space<vmem>>, vector<8x1xf32>
    %20 = arith.mulf %15, %19 : vector<8x1xf32>
    %cst_12 = arith.constant dense<0.000000e+00> : vector<8xf32>
    %21 = vector.multi_reduction <add>, %18, %cst_12 [1] : vector<8x8xf32> to vector<8xf32>
    %22 = vector.shape_cast %21 : vector<8xf32> to vector<8x1xf32>
    %23 = arith.addf %20, %22 : vector<8x1xf32>
    %c0_13 = arith.constant 0 : index
    %c0_14 = arith.constant 0 : index
    %24 = vector.load %arg9[%c0_13, %c0_14] : memref<8x1xf32, #tpu.memory_space<vmem>>, vector<8x1xf32>
    tpu.vector_store %arg9[%c0_13, %c0_14], %23 {strides = array<i32>} : memref<8x1xf32, #tpu.memory_space<vmem>>, vector<8x1xf32>,
    %c0_15 = arith.constant 0 : index
    %c0_16 = arith.constant 0 : index
    %c0_17 = arith.constant 0 : index
    %25 = vector.load %arg6[%c0_15, %c0_16, %c0_17] : memref<1x8x8xf32, #tpu.memory_space<vmem>>, vector<1x8x8xf32>
    %26 = vector.shape_cast %25 : vector<1x8x8xf32> to vector<8x8xf32>
    %27 = arith.mulf %18, %26 : vector<8x8xf32>
    %c0_18 = arith.constant 0 : index
    %c0_19 = arith.constant 0 : index
    %28 = vector.load %arg10[%c0_18, %c0_19] : memref<8x32xf32, #tpu.memory_space<vmem>>, vector<8x32xf32>
    %29 = vector.broadcast %15 : vector<8x1xf32> to vector<8x32xf32>
    %30 = arith.mulf %29, %28 : vector<8x32xf32>
    %c0_20 = arith.constant 0 : index
    %c0_21 = arith.constant 0 : index
    %c0_22 = arith.constant 0 : index
    %31 = vector.load %arg5[%c0_20, %c0_21, %c0_22] : memref<1x8x32xf32, #tpu.memory_space<vmem>>, vector<1x8x32xf32>
    %32 = vector.shape_cast %31 : vector<1x8x32xf32> to vector<8x32xf32>
    %cst_23 = arith.constant dense<0.000000e+00> : vector<8x32xf32>
    %33 = tpu.matmul %27, %32, %cst_23 {dimension_numbers = #tpu.dot_dimension_numbers<[1], [0], [0], [1], [0, 0, 1, 1], [], []>} : vector<8x8xf32>, vector<8x32xf32>, vector<8x32xf32> -> vector<8x32xf32>
    %34 = arith.addf %30, %33 : vector<8x32xf32>
    %c0_24 = arith.constant 0 : index
    %c0_25 = arith.constant 0 : index
    %35 = vector.load %arg10[%c0_24, %c0_25] : memref<8x32xf32, #tpu.memory_space<vmem>>, vector<8x32xf32>
    tpu.vector_store %arg10[%c0_24, %c0_25], %34 {strides = array<i32>} : memref<8x32xf32, #tpu.memory_space<vmem>>, vector<8x32xf32>,
    %c0_26 = arith.constant 0 : index
    %c0_27 = arith.constant 0 : index
    %36 = vector.load %arg8[%c0_26, %c0_27] : memref<8x1xf32, #tpu.memory_space<vmem>>, vector<8x1xf32>
    tpu.vector_store %arg8[%c0_26, %c0_27], %13 {strides = array<i32>} : memref<8x1xf32, #tpu.memory_space<vmem>>, vector<8x1xf32>,
    %c0_i32_28 = arith.constant 0 : i32
    %37 = arith.cmpi eq, %arg2, %c0_i32_28 : i32
    %38 = arith.extui %37 : i1 to i32
    %c0_i32_29 = arith.constant 0 : i32
    %39 = arith.cmpi ne, %38, %c0_i32_29 : i32
    scf.if %39 {
      %c0_30 = arith.constant 0 : index
      %c0_31 = arith.constant 0 : index
      %40 = vector.load %arg10[%c0_30, %c0_31] : memref<8x32xf32, #tpu.memory_space<vmem>>, vector<8x32xf32>
      %c0_32 = arith.constant 0 : index
      %c0_33 = arith.constant 0 : index
      %41 = vector.load %arg9[%c0_32, %c0_33] : memref<8x1xf32, #tpu.memory_space<vmem>>, vector<8x1xf32>
      %42 = vector.broadcast %41 : vector<8x1xf32> to vector<8x32xf32>
      %43 = arith.divf %40, %42 : vector<8x32xf32>
      %c0_34 = arith.constant 0 : index
      %c0_35 = arith.constant 0 : index
      %c0_36 = arith.constant 0 : index
      %44 = vector.load %arg7[%c0_34, %c0_35, %c0_36] : memref<1x8x32xf32, #tpu.memory_space<vmem>>, vector<1x8x32xf32>
      %45 = vector.shape_cast %44 : vector<1x8x32xf32> to vector<8x32xf32>
      %46 = vector.shape_cast %43 : vector<8x32xf32> to vector<1x8x32xf32>
      tpu.vector_store %arg7[%c0_34, %c0_35, %c0_36], %46 {strides = array<i32>} : memref<1x8x32xf32, #tpu.memory_space<vmem>>, vector<1x8x32xf32>,
    } else {
    }
    return
  }
  func.func @transform_0(%arg0: i32, %arg1: i32, %arg2: i32) -> (i32, i32, i32) {
    %c0_i32 = arith.constant 0 : i32
    %c0_i32_0 = arith.constant 0 : i32
    return %arg0, %arg1, %c0_i32 : i32, i32, i32
  }
  func.func @transform_1(%arg0: i32, %arg1: i32, %arg2: i32) -> (i32, i32, i32) {
    %c0_i32 = arith.constant 0 : i32
    %c0_i32_0 = arith.constant 0 : i32
    return %arg0, %arg2, %c0_i32 : i32, i32, i32
  }
  func.func @transform_2(%arg0: i32, %arg1: i32, %arg2: i32) -> (i32, i32, i32) {
    %c0_i32 = arith.constant 0 : i32
    %c0_i32_0 = arith.constant 0 : i32
    return %arg0, %arg2, %c0_i32 : i32, i32, i32
  }
  func.func @transform_3(%arg0: i32, %arg1: i32, %arg2: i32) -> (i32, i32, i32) {
    %c0_i32 = arith.constant 0 : i32
    return %arg0, %arg1, %arg2 : i32, i32, i32
  }
  func.func @transform_4(%arg0: i32, %arg1: i32, %arg2: i32) -> (i32, i32, i32) {
    %c0_i32 = arith.constant 0 : i32
    %c0_i32_0 = arith.constant 0 : i32
    return %arg0, %arg1, %c0_i32 : i32, i32, i32
  }
}

</mosaic_0001>

<llo_original>
// kernel: tpu_custom_call.1
$region0: #{tpu_custom_call.1}
  #allocation0 [shape = 'u32[]', space=smem, size = 0x4, offset = 0x4, fixed_abs, tag = 'smem constant byte address 0x4 - core index']
  #allocation1 [shape = 'u32[144,128]{1,0:T(1,128)}', space=vmem, size = 0x12000, scoped, tag = 'internal scratch']
  #allocation2 [shape = 'f32[8,1]{1,0:T(8,128)}', space=vmem, size = 0x1000, scoped, tag = 'scratch operand']
  #allocation3 [shape = 'f32[8,1]{1,0:T(8,128)}', space=vmem, size = 0x1000, scoped, tag = 'scratch operand']
  #allocation4 [shape = 'f32[8,32]{1,0:T(8,128)}', space=vmem, size = 0x1000, scoped, tag = 'scratch operand']
  %s0 = inlined_call_operand.hbm [shape: f32[2,8,32], index: 0, kind: input, shape index: {}]
  %s1 = inlined_call_operand.hbm [shape: f32[2,8,32], index: 1, kind: input, shape index: {}]
  %s2 = inlined_call_operand.hbm [shape: f32[2,8,32], index: 2, kind: input, shape index: {}]
  %s3 = inlined_call_operand.hbm [shape: f32[2,8,8], index: 3, kind: input, shape index: {}]
  %s4 = inlined_call_operand.hbm [shape: f32[2,8,32], index: 4, kind: output, shape index: {}]
  %s5 = sld [smem:[#allocation0]]
  $region73: #{tpu_custom_call.1} parent=0
    _
  %s7 = ssub.s32 1, %s5
  %s8 = scalar_select 0, %s7, %s5
  $region1: #{tpu_custom_call.1} parent=0
    #allocation5 [shape = 'u8[8192]{0}', space=vmem, size = 0x2000, scoped, tag = 'input window, operand 0']
    #allocation6 [shape = 's32[2]{0}', space=sflag, size = 0x8, scoped, tag = 'scoped memory for tpu_custom_call.1']
    #allocation7 [shape = 's32[2]{0}', space=sflag, size = 0x8, scoped, tag = 'scoped memory for tpu_custom_call.1']
    #allocation8 [shape = 'u8[8192]{0}', space=vmem, size = 0x2000, scoped, tag = 'input window, operand 1']
    #allocation9 [shape = 's32[2]{0}', space=sflag, size = 0x8, scoped, tag = 'scoped memory for tpu_custom_call.1']
    #allocation10 [shape = 'u8[8192]{0}', space=vmem, size = 0x2000, scoped, tag = 'input window, operand 2']
    #allocation11 [shape = 'u8[8192]{0}', space=vmem, size = 0x2000, scoped, tag = 'input window, operand 3']
    #allocation12 [shape = 's32[2]{0}', space=sflag, size = 0x8, scoped, tag = 'scoped memory for tpu_custom_call.1']
    #allocation13 [shape = 'u8[8192]{0}', space=vmem, size = 0x2000, scoped, tag = 'output window, operand 0']
    %9 = vsyncpa [#allocation6], 0
    %s10 = scalar_lea.sflag [#allocation6], 1
    %11 = vsyncpa %s10, 0
    %12 = vsyncpa [#allocation9], 0
    %s13 = scalar_lea.sflag [#allocation9], 1
    %14 = vsyncpa %s13, 0
    %15 = vsyncpa [#allocation12], 0
    %s16 = scalar_lea.sflag [#allocation12], 1
    %17 = vsyncpa %s16, 0
    %18 = vsyncpa [#allocation7], 0
    %s19 = scalar_lea.sflag [#allocation7], 1
    %20 = vsyncpa %s19, 0
    loop: start=0, step=1, limit=4
    $region2: #{tpu_custom_call.1} parent=1 // loop_pre_header
      _
    $region3: #{tpu_custom_call.1} parent=1 // loop_header
      %s22 = sphi 0, %s26
      %p23 = scmp.ge.s32.totalorder %s22, 4
      %s29 = sphi 0, %s48
      %s30 = sphi 0, %s44
      %s31 = sphi 0, %s40
      %s32 = sphi 0, %s29
      %s33 = sphi 0, %s30
      %s34 = sphi 0, %s31
      %s35 = sphi 0, %s32
      %s36 = sphi 0, %s33
      %s37 = sphi 0, %s34
      %s53 = sphi 0, %s55
      %s56 = sphi 0, %s53
      %s57 = sphi 0, %s56
      %s73 = sphi 0, %s57
      %s81 = sphi 0, %s83
      %s84 = sphi 0, %s81
      %s85 = sphi 0, %s84
      %s101 = sphi 0, %s85
      %s109 = sphi 0, %s111
      %s112 = sphi 0, %s109
      %s113 = sphi 0, %s112
      %s129 = sphi 0, %s113
      %s139 = sphi 0, %s141
      %s142 = sphi 0, %s139
      %s143 = sphi 0, %s142
      %s159 = sphi 0, %s143
      %s167 = sphi 0, %s169
      %s170 = sphi 0, %s167
      %s171 = sphi 0, %s170
      %s187 = sphi 0, %s171
    $region4: #{tpu_custom_call.1} parent=1 // loop_header_branch
      %25 = sbr.rel (%p23) target = $region8
    $region5: #{tpu_custom_call.1} parent=1 // loop_body
      %s27 = ssub.s32 %s22, 1
      %s28 = ssub.s32 %s22, 2
      %s38 = sadd.s32 1, %s31
      %p39 = scmp.ge.s32.totalorder %s38, 1
      %s40 = scalar_select %p39, 0, %s38
      %s41 = sadd.s32 1, %s30
      %s42 = scalar_select %p39, %s41, %s30
      %p43 = scmp.ge.s32.totalorder %s42, 1
      %s44 = scalar_select %p43, 0, %s42
      %s45 = sadd.s32 1, %s29
      %s46 = scalar_select %p43, %s45, %s29
      %p47 = scmp.ge.s32.totalorder %s46, 2
      %s48 = scalar_select %p47, 0, %s46
      %s49 = ssub.s32 %s29, %s48
      %s50 = ssub.s32 %s30, %s44
      %s51 = sor.u32 %s49, %s50
      %p52 = scmp.eq.s32.totalorder %s51, 0
      %s54 = sadd.s32 %s53, 1
      %s55 = scalar_select %p52, %s53, %s54
      %p58 = pneg %p52
      %p59 = scmp.eq.s32.totalorder %s22, 1
      %p60 = por %p58, %p59
      %p61 = scmp.ne.s32.totalorder %s53, %s56
      %p62 = scmp.eq.s32.totalorder %s22, 0
      %p63 = por %p61, %p62
      %p64 = scmp.ne.s32.totalorder %s53, %s56
      %p65 = scmp.eq.s32.totalorder %s27, 1
      %p66 = por %p64, %p65
      %p67 = scmp.ne.s32.totalorder %s56, %s57
      %p68 = scmp.eq.s32.totalorder %s27, 0
      %p69 = por %p67, %p68
      %p70 = scmp.ne.s32.totalorder %s56, %s57
      %p71 = scmp.eq.s32.totalorder %s28, 1
      %p72 = por %p70, %p71
      %p74 = scmp.ne.s32.totalorder %s57, %s73
      %p75 = scmp.eq.s32.totalorder %s28, 0
      %p76 = por %p74, %p75
      %s77 = ssub.s32 %s29, %s48
      %s78 = ssub.s32 %s31, %s40
      %s79 = sor.u32 %s77, %s78
      %p80 = scmp.eq.s32.totalorder %s79, 0
      %s82 = sadd.s32 %s81, 1
      %s83 = scalar_select %p80, %s81, %s82
      %p86 = pneg %p80
      %p87 = scmp.eq.s32.totalorder %s22, 1
      %p88 = por %p86, %p87
      %p89 = scmp.ne.s32.totalorder %s81, %s84
      %p90 = scmp.eq.s32.totalorder %s22, 0
      %p91 = por %p89, %p90
      %p92 = scmp.ne.s32.totalorder %s81, %s84
      %p93 = scmp.eq.s32.totalorder %s27, 1
      %p94 = por %p92, %p93
      %p95 = scmp.ne.s32.totalorder %s84, %s85
      %p96 = scmp.eq.s32.totalorder %s27, 0
      %p97 = por %p95, %p96
      %p98 = scmp.ne.s32.totalorder %s84, %s85
      %p99 = scmp.eq.s32.totalorder %s28, 1
      %p100 = por %p98, %p99
      %p102 = scmp.ne.s32.totalorder %s85, %s101
      %p103 = scmp.eq.s32.totalorder %s28, 0
      %p104 = por %p102, %p103
      %s105 = ssub.s32 %s29, %s48
      %s106 = ssub.s32 %s31, %s40
      %s107 = sor.u32 %s105, %s106
      %p108 = scmp.eq.s32.totalorder %s107, 0
      %s110 = sadd.s32 %s109, 1
      %s111 = scalar_select %p108, %s109, %s110
      %p114 = pneg %p108
      %p115 = scmp.eq.s32.totalorder %s22, 1
      %p116 = por %p114, %p115
      %p117 = scmp.ne.s32.totalorder %s109, %s112
      %p118 = scmp.eq.s32.totalorder %s22, 0
      %p119 = por %p117, %p118
      %p120 = scmp.ne.s32.totalorder %s109, %s112
      %p121 = scmp.eq.s32.totalorder %s27, 1
      %p122 = por %p120, %p121
      %p123 = scmp.ne.s32.totalorder %s112, %s113
      %p124 = scmp.eq.s32.totalorder %s27, 0
      %p125 = por %p123, %p124
      %p126 = scmp.ne.s32.totalorder %s112, %s113
      %p127 = scmp.eq.s32.totalorder %s28, 1
      %p128 = por %p126, %p127
      %p130 = scmp.ne.s32.totalorder %s113, %s129
      %p131 = scmp.eq.s32.totalorder %s28, 0
      %p132 = por %p130, %p131
      %s133 = ssub.s32 %s29, %s48
      %s134 = ssub.s32 %s30, %s44
      %s135 = sor.u32 %s133, %s134
      %s136 = ssub.s32 %s31, %s40
      %s137 = sor.u32 %s135, %s136
      %p138 = scmp.eq.s32.totalorder %s137, 0
      %s140 = sadd.s32 %s139, 1
      %s141 = scalar_select %p138, %s139, %s140
      %p144 = pneg %p138
      %p145 = scmp.eq.s32.totalorder %s22, 1
      %p146 = por %p144, %p145
      %p147 = scmp.ne.s32.totalorder %s139, %s142
      %p148 = scmp.eq.s32.totalorder %s22, 0
      %p149 = por %p147, %p148
      %p150 = scmp.ne.s32.totalorder %s139, %s142
      %p151 = scmp.eq.s32.totalorder %s27, 1
      %p152 = por %p150, %p151
      %p153 = scmp.ne.s32.totalorder %s142, %s143
      %p154 = scmp.eq.s32.totalorder %s27, 0
      %p155 = por %p153, %p154
      %p156 = scmp.ne.s32.totalorder %s142, %s143
      %p157 = scmp.eq.s32.totalorder %s28, 1
      %p158 = por %p156, %p157
      %p160 = scmp.ne.s32.totalorder %s143, %s159
      %p161 = scmp.eq.s32.totalorder %s28, 0
      %p162 = por %p160, %p161
      %s163 = ssub.s32 %s29, %s48
      %s164 = ssub.s32 %s30, %s44
      %s165 = sor.u32 %s163, %s164
      %p166 = scmp.eq.s32.totalorder %s165, 0
      %s168 = sadd.s32 %s167, 1
      %s169 = scalar_select %p166, %s167, %s168
      %p172 = pneg %p166
      %p173 = scmp.eq.s32.totalorder %s22, 1
      %p174 = por %p172, %p173
      %p175 = scmp.ne.s32.totalorder %s167, %s170
      %p176 = scmp.eq.s32.totalorder %s22, 0
      %p177 = por %p175, %p176
      %p178 = scmp.ne.s32.totalorder %s167, %s170
      %p179 = scmp.eq.s32.totalorder %s27, 1
      %p180 = por %p178, %p179
      %p181 = scmp.ne.s32.totalorder %s170, %s171
      %p182 = scmp.eq.s32.totalorder %s27, 0
      %p183 = por %p181, %p182
      %p184 = scmp.ne.s32.totalorder %s170, %s171
      %p185 = scmp.eq.s32.totalorder %s28, 1
      %p186 = por %p184, %p185
      %p188 = scmp.ne.s32.totalorder %s171, %s187
      %p189 = scmp.eq.s32.totalorder %s28, 0
      %p190 = por %p188, %p189
      %p191 = scmp.le.s32.totalorder 1, %s22
      %p192 = scmp.lt.s32.totalorder %s22, 3
      %p193 = pnand %p191, %p192
      %p194 = pneg %p193
      // Predicated region
      $region9: #{tpu_custom_call.1} parent=5 // pred_check
        _
      $region10: #{tpu_custom_call.1} parent=5 // pred_check_branch
        %196 = sbr.rel (%p193) target = $region12
      $region11: #{tpu_custom_call.1} parent=5 // pred_region
        %s197 = ssub.s32 %s22, 1
      $region12: #{tpu_custom_call.1} parent=5 // pred_fallthru
        _
      %p198 = scmp.lt.s32.totalorder %s22, 2
      // Predicated region
      $region13: #{tpu_custom_call.1} parent=5 // pred_check
        %p199 = pneg %p198
      $region14: #{tpu_custom_call.1} parent=5 // pred_check_branch
        %201 = sbr.rel (%p199) target = $region16
      $region15: #{tpu_custom_call.1} parent=5 // pred_region
        // Predicated region
        $region17: #{tpu_custom_call.1} parent=15 // pred_check
          %p202 = pneg %p63
        $region18: #{tpu_custom_call.1} parent=15 // pred_check_branch
          %204 = sbr.rel (%p202) target = $region20
        $region19: #{tpu_custom_call.1} parent=15 // pred_region
          %s205 = sand.u32 %s53, 1
          %s206 = scalar_lea.sflag [#allocation6], %s205
          %s207 = sand.u32 %s53, 1
          %s208 = smul.addr %s207, 8
          %s209 = scalar_lea.vmem [#allocation5], %s208
          %s211 = ssub.s32 128, 128
          %212 = vsyncadd %s206, %s211
          %s213 = sadd.s32 %s30, %s29
          %s214 = smul.addr %s213, 128
          %s215 = scalar_lea.hbm %s0, %s214
          %s217 = sshll.u32 %s209, 4
          %s218 = int_to_ptr.vmem [resolvable:$true] %s217
          %220 = dma.hbm_to_vmem [thread:$0]  %s215, 128, %s218, %s206
        $region20: #{tpu_custom_call.1} parent=15 // pred_fallthru
          _
        // Predicated region
        $region21: #{tpu_custom_call.1} parent=15 // pred_check
          %p221 = pneg %p91
        $region22: #{tpu_custom_call.1} parent=15 // pred_check_branch
          %223 = sbr.rel (%p221) target = $region24
        $region23: #{tpu_custom_call.1} parent=15 // pred_region
          %s224 = sand.u32 %s22, 1
          %s225 = scalar_lea.sflag [#allocation9], %s224
          %s226 = sand.u32 %s81, 1
          %s227 = smul.addr %s226, 8
          %s228 = scalar_lea.vmem [#allocation8], %s227
          %s230 = ssub.s32 128, 128
          %231 = vsyncadd %s225, %s230
          %s232 = sadd.s32 %s31, %s29
          %s233 = smul.addr %s232, 128
          %s234 = scalar_lea.hbm %s1, %s233
          %s236 = sshll.u32 %s228, 4
          %s237 = int_to_ptr.vmem [resolvable:$true] %s236
          %239 = dma.hbm_to_vmem [thread:$0]  %s234, 128, %s237, %s225
        $region24: #{tpu_custom_call.1} parent=15 // pred_fallthru
          _
        // Predicated region
        $region25: #{tpu_custom_call.1} parent=15 // pred_check
          %p240 = pneg %p119
        $region26: #{tpu_custom_call.1} parent=15 // pred_check_branch
          %242 = sbr.rel (%p240) target = $region28
        $region27: #{tpu_custom_call.1} parent=15 // pred_region
          %s243 = sand.u32 %s22, 1
          %s244 = scalar_lea.sflag [#allocation9], %s243
          %s245 = sand.u32 %s109, 1
          %s246 = smul.addr %s245, 8
          %s247 = scalar_lea.vmem [#allocation10], %s246
          %s249 = ssub.s32 128, 128
          %250 = vsyncadd %s244, %s249
          %s251 = sadd.s32 %s31, %s29
          %s252 = smul.addr %s251, 128
          %s253 = scalar_lea.hbm %s2, %s252
          %s255 = sshll.u32 %s247, 4
          %s256 = int_to_ptr.vmem [resolvable:$true] %s255
          %258 = dma.hbm_to_vmem [thread:$0]  %s253, 128, %s256, %s244
        $region28: #{tpu_custom_call.1} parent=15 // pred_fallthru
          _
        // Predicated region
        $region29: #{tpu_custom_call.1} parent=15 // pred_check
          %p259 = pneg %p149
        $region30: #{tpu_custom_call.1} parent=15 // pred_check_branch
          %261 = sbr.rel (%p259) target = $region32
        $region31: #{tpu_custom_call.1} parent=15 // pred_region
          %s262 = sand.u32 %s139, 1
          %s263 = scalar_lea.sflag [#allocation12], %s262
          %s264 = sand.u32 %s139, 1
          %s265 = smul.addr %s264, 8
          %s266 = scalar_lea.vmem [#allocation11], %s265
          %s268 = ssub.s32 128, 128
          %269 = vsyncadd %s263, %s268
          %s270 = sadd.s32 %s31, %s30
          %s271 = sadd.s32 %s270, %s29
          %s272 = smul.addr %s271, 128
          %s273 = scalar_lea.hbm %s3, %s272
          %s275 = sshll.u32 %s266, 4
          %s276 = int_to_ptr.vmem [resolvable:$true] %s275
          %278 = dma.hbm_to_vmem [thread:$0]  %s273, 128, %s276, %s263
        $region32: #{tpu_custom_call.1} parent=15 // pred_fallthru
          _
      $region16: #{tpu_custom_call.1} parent=5 // pred_fallthru
        _
      %p279 = scmp.le.s32.totalorder 1, %s22
      %p280 = scmp.lt.s32.totalorder %s22, 3
      %p281 = pnand %p279, %p280
      %p282 = pneg %p281
      // Predicated region
      $region33: #{tpu_custom_call.1} parent=5 // pred_check
        _
      $region34: #{tpu_custom_call.1} parent=5 // pred_check_branch
        %284 = sbr.rel (%p281) target = $region36
      $region35: #{tpu_custom_call.1} parent=5 // pred_region
        %s285 = ssub.s32 %s22, 1
        %s286 = sand.u32 %s56, 1
        %s287 = scalar_lea.sflag [#allocation6], %s286
        %s288 = sand.u32 %s56, 1
        %s289 = smul.addr %s288, 8
        %s290 = scalar_lea.vmem [#allocation5], %s289
        // Predicated region
        $region37: #{tpu_custom_call.1} parent=35 // pred_check
          %p291 = pneg %p69
        $region38: #{tpu_custom_call.1} parent=35 // pred_check_branch
          %293 = sbr.rel (%p291) target = $region40
        $region39: #{tpu_custom_call.1} parent=35 // pred_region
          %294 = dma.done %s287, 128
        $region40: #{tpu_custom_call.1} parent=35 // pred_fallthru
          _
        %s295 = sand.u32 %s27, 1
        %s296 = scalar_lea.sflag [#allocation9], %s295
        %s297 = sand.u32 %s84, 1
        %s298 = smul.addr %s297, 8
        %s299 = scalar_lea.vmem [#allocation8], %s298
        // Predicated region
        $region41: #{tpu_custom_call.1} parent=35 // pred_check
          %p300 = pneg %p97
        $region42: #{tpu_custom_call.1} parent=35 // pred_check_branch
          %302 = sbr.rel (%p300) target = $region44
        $region43: #{tpu_custom_call.1} parent=35 // pred_region
          %303 = dma.done %s296, 128
        $region44: #{tpu_custom_call.1} parent=35 // pred_fallthru
          _
        %s304 = sand.u32 %s27, 1
        %s305 = scalar_lea.sflag [#allocation9], %s304
        %s306 = sand.u32 %s112, 1
        %s307 = smul.addr %s306, 8
        %s308 = scalar_lea.vmem [#allocation10], %s307
        // Predicated region
        $region45: #{tpu_custom_call.1} parent=35 // pred_check
          %p309 = pneg %p125
        $region46: #{tpu_custom_call.1} parent=35 // pred_check_branch
          %311 = sbr.rel (%p309) target = $region48
        $region47: #{tpu_custom_call.1} parent=35 // pred_region
          %312 = dma.done %s305, 128
        $region48: #{tpu_custom_call.1} parent=35 // pred_fallthru
          _
        %s313 = sand.u32 %s142, 1
        %s314 = scalar_lea.sflag [#allocation12], %s313
        %s315 = sand.u32 %s142, 1
        %s316 = smul.addr %s315, 8
        %s317 = scalar_lea.vmem [#allocation11], %s316
        // Predicated region
        $region49: #{tpu_custom_call.1} parent=35 // pred_check
          %p318 = pneg %p155
        $region50: #{tpu_custom_call.1} parent=35 // pred_check_branch
          %320 = sbr.rel (%p318) target = $region52
        $region51: #{tpu_custom_call.1} parent=35 // pred_region
          %321 = dma.done %s314, 128
        $region52: #{tpu_custom_call.1} parent=35 // pred_fallthru
          _
        %s322 = sand.u32 %s56, 1
        %s323 = scalar_lea.sflag [#allocation6], %s322
        %s324 = sand.u32 %s56, 1
        %s325 = smul.addr %s324, 8
        %s326 = scalar_lea.vmem [#allocation5], %s325
        %p327 = pneg %p69
        %p328 = pneg %p66
        %s329 = sand.u32 %s27, 1
        %s330 = scalar_lea.sflag [#allocation9], %s329
        %s331 = sand.u32 %s84, 1
        %s332 = smul.addr %s331, 8
        %s333 = scalar_lea.vmem [#allocation8], %s332
        %p334 = pneg %p97
        %p335 = pneg %p94
        %s336 = sand.u32 %s27, 1
        %s337 = scalar_lea.sflag [#allocation9], %s336
        %s338 = sand.u32 %s112, 1
        %s339 = smul.addr %s338, 8
        %s340 = scalar_lea.vmem [#allocation10], %s339
        %p341 = pneg %p125
        %p342 = pneg %p122
        %s343 = sand.u32 %s142, 1
        %s344 = scalar_lea.sflag [#allocation12], %s343
        %s345 = sand.u32 %s142, 1
        %s346 = smul.addr %s345, 8
        %s347 = scalar_lea.vmem [#allocation11], %s346
        %p348 = pneg %p155
        %p349 = pneg %p152
        %p350 = pneg %p183
        %p351 = pneg %p180
        %s352 = sand.u32 %s170, 1
        %s353 = scalar_lea.sflag [#allocation7], %s352
        %s354 = sand.u32 %s170, 1
        %s355 = smul.addr %s354, 8
        %s356 = scalar_lea.vmem [#allocation13], %s355
        %p357 = scmp.eq.s32.totalorder %s34, 0
        // Predicated region
        $region53: #{tpu_custom_call.1} parent=35 // pred_check
          %p358 = pneg %p357
        $region54: #{tpu_custom_call.1} parent=35 // pred_check_branch
          %360 = sbr.rel (%p358) target = $region56
        $region55: #{tpu_custom_call.1} parent=35 // pred_region
          %vm361 = vcmask 7168
          %362 = vst.msk [vmem:[#allocation2] sm:$0xff] %vm361, -inf
          %363 = vst.msk [vmem:[#allocation3] sm:$0xff] %vm361, 0.0
          %vm364 = vcmask 261120
          %365 = vst.msk [vmem:[#allocation4] sm:$0xff] %vm364, 0.0
        $region56: #{tpu_custom_call.1} parent=35 // pred_fallthru
          _
        %v366 = vld [vmem:[%s290] sm:$0xff]
        %v367 = vmul.f32 %v366, 0.17677669
        %v368 = vld [vmem:[%s299] sm:$0xff]
        %vm369 = vcmask 261120
        %v371 = vsel %vm369, %v367, 0
        %v374 = vsel %vm369, %v368, 0
        %376 = vmatprep.subr.mxu0 0.0
        %377 = vmatpush1.xpose.msra.mxu0 %v374
        %378 = vmatprep.subr.mxu0 0.0
        %379 = vmatpush1.xpose.msra.mxu0 0.0
        %380 = vmatprep.subr.mxu0 0.0
        %381 = vmatpush1.xpose.msra.mxu0 0.0
        %382 = vmatprep.subr.mxu0 0.0
        %383 = vmatpush1.xpose.msra.mxu0 0.0
        %384 = vmatprep.subr.mxu0 0.0
        %385 = vmatpush1.xpose.msra.mxu0 0.0
        %386 = vmatprep.subr.mxu0 0.0
        %387 = vmatpush1.xpose.msra.mxu0 0.0
        %388 = vmatprep.subr.mxu0 0.0
        %389 = vmatpush1.xpose.msra.mxu0 0.0
        %390 = vmatprep.subr.mxu0 0.0
        %391 = vmatpush1.xpose.msra.mxu0 0.0
        %392 = vmatprep.subr.mxu0 0.0
        %393 = vmatpush1.xpose.msra.mxu0 0.0
        %394 = vmatprep.subr.mxu0 0.0
        %395 = vmatpush1.xpose.msra.mxu0 0.0
        %396 = vmatprep.subr.mxu0 0.0
        %397 = vmatpush1.xpose.msra.mxu0 0.0
        %398 = vmatprep.subr.mxu0 0.0
        %399 = vmatpush1.xpose.msra.mxu0 0.0
        %400 = vmatprep.subr.mxu0 0.0
        %401 = vmatpush1.xpose.msra.mxu0 0.0
        %402 = vmatprep.subr.mxu0 0.0
        %403 = vmatpush1.xpose.msra.mxu0 0.0
        %404 = vmatprep.subr.mxu0 0.0
        %405 = vmatpush1.xpose.msra.mxu0 0.0
        %406 = vmatprep.subr.mxu0 0.0
        %407 = vmatpush1.xpose.msra.mxu0 0.0
        %408 = vmatprep.subr.mxu0 0.0
        %409 = vmatpush1.xpose.msra.mxu0 0.0
        %410 = vmatprep.subr.mxu0 0.0
        %411 = vmatpush1.xpose.msra.mxu0 0.0
        %412 = vmatprep.subr.mxu0 0.0
        %413 = vmatpush1.xpose.msra.mxu0 0.0
        %414 = vmatprep.subr.mxu0 0.0
        %415 = vmatpush1.xpose.msra.mxu0 0.0
        %416 = vmatprep.subr.mxu0 0.0
        %417 = vmatpush1.xpose.msra.mxu0 0.0
        %418 = vmatprep.subr.mxu0 0.0
        %419 = vmatpush1.xpose.msra.mxu0 0.0
        %420 = vmatprep.subr.mxu0 0.0
        %421 = vmatpush1.xpose.msra.mxu0 0.0
        %422 = vmatprep.subr.mxu0 0.0
        %423 = vmatpush1.xpose.msra.mxu0 0.0
        %424 = vmatprep.subr.mxu0 0.0
        %425 = vmatpush1.xpose.msra.mxu0 0.0
        %426 = vmatprep.subr.mxu0 0.0
        %427 = vmatpush1.xpose.msra.mxu0 0.0
        %428 = vmatprep.subr.mxu0 0.0
        %429 = vmatpush1.xpose.msra.mxu0 0.0
        %430 = vmatprep.subr.mxu0 0.0
        %431 = vmatpush1.xpose.msra.mxu0 0.0
        %432 = vmatprep.subr.mxu0 0.0
        %433 = vmatpush1.xpose.msra.mxu0 0.0
        %434 = vmatprep.subr.mxu0 0.0
        %435 = vmatpush1.xpose.msra.mxu0 0.0
        %436 = vmatprep.subr.mxu0 0.0
        %437 = vmatpush1.xpose.msra.mxu0 0.0
        %438 = vmatprep.subr.mxu0 0.0
        %439 = vmatpush1.xpose.msra.mxu0 0.0
        %440 = vmatprep.mubr.f32.mxu0 0.0
        %441 = vmatmul.mubr.f32.gmra.mrb[0].mxu0 %v371
        %v442 = vpop.f32.mrb[0].mxu0
        %v443 = vadd.f32 0.0, %v442
        %v444 = vpop.f32.mrb[0].mxu0
        %445 = vdwg.mxu0
        %v446 = vld [vmem:[#allocation2] sm:$0xff]
        %vm447 = vcmask 64512
        %v448 = vsel %vm447, %v443, -inf
        %449 = vmax.xlane.f32.xlu0 %v448
        %v450 = vpop.xlane.xlu0 %449
        %v451 = vmax.f32 %v446, %v450
        %v452 = vsub.f32 %v446, %v451
        %v453 = vmul.f32 %v452, 1.442695
        %v454 = vpow.pop %v453
        %456 = vset.pattern.permute.xlu0 0
        %457 = vperm.xlu0 %456, %v451
        %v458 = vpop.permute.xlu0 %457
        %v460 = vsub.f32 %v443, %v458
        %v461 = vmul.f32 %v460, 1.442695
        %v462 = vpow.pop %v461
        %v463 = vld [vmem:[#allocation3] sm:$0xff]
        %v464 = vmul.f32 %v454, %v463
        %v465 = vsel %vm447, %v462, 0.0
        %466 = vadd.xlane.f32.xlu0 %v465
        %v467 = vpop.xlane.xlu0 %466
        %v468 = vadd.f32 %v464, %v467
        %vm469 = vcmask 7168
        %470 = vst.msk [vmem:[#allocation3] sm:$0xff] %vm469, %v468
        %v471 = vld [vmem:[%s317] sm:$0xff]
        %v472 = vmul.f32 %v462, %v471
        %v473 = vld [vmem:[#allocation4] sm:$0xff]
        %475 = vset.pattern.permute.xlu0 0
        %476 = vperm.xlu0 %475, %v454
        %v477 = vpop.permute.xlu0 %476
        %v479 = vmul.f32 %v477, %v473
        %v480 = vld [vmem:[%s308] sm:$0xff]
        %v482 = vsel %vm447, %v472, 0
        %484 = vmatprep.subr.mxu0 0.0
        %485 = vmatpush1.msra.mxu0 %v480
        %486 = vmatprep.subr.mxu0 0.0
        %487 = vmatpush1.msra.mxu0 0.0
        %488 = vmatprep.subr.mxu0 0.0
        %489 = vmatpush1.msra.mxu0 0.0
        %490 = vmatprep.subr.mxu0 0.0
        %491 = vmatpush1.msra.mxu0 0.0
        %492 = vmatprep.subr.mxu0 0.0
        %493 = vmatpush1.msra.mxu0 0.0
        %494 = vmatprep.subr.mxu0 0.0
        %495 = vmatpush1.msra.mxu0 0.0
        %496 = vmatprep.subr.mxu0 0.0
        %497 = vmatpush1.msra.mxu0 0.0
        %498 = vmatprep.subr.mxu0 0.0
        %499 = vmatpush1.msra.mxu0 0.0
        %500 = vmatprep.subr.mxu0 0.0
        %501 = vmatpush1.msra.mxu0 0.0
        %502 = vmatprep.subr.mxu0 0.0
        %503 = vmatpush1.msra.mxu0 0.0
        %504 = vmatprep.subr.mxu0 0.0
        %505 = vmatpush1.msra.mxu0 0.0
        %506 = vmatprep.subr.mxu0 0.0
        %507 = vmatpush1.msra.mxu0 0.0
        %508 = vmatprep.subr.mxu0 0.0
        %509 = vmatpush1.msra.mxu0 0.0
        %510 = vmatprep.subr.mxu0 0.0
        %511 = vmatpush1.msra.mxu0 0.0
        %512 = vmatprep.subr.mxu0 0.0
        %513 = vmatpush1.msra.mxu0 0.0
        %514 = vmatprep.subr.mxu0 0.0
        %515 = vmatpush1.msra.mxu0 0.0
        %516 = vmatprep.subr.mxu0 0.0
        %517 = vmatpush1.msra.mxu0 0.0
        %518 = vmatprep.subr.mxu0 0.0
        %519 = vmatpush1.msra.mxu0 0.0
        %520 = vmatprep.subr.mxu0 0.0
        %521 = vmatpush1.msra.mxu0 0.0
        %522 = vmatprep.subr.mxu0 0.0
        %523 = vmatpush1.msra.mxu0 0.0
        %524 = vmatprep.subr.mxu0 0.0
        %525 = vmatpush1.msra.mxu0 0.0
        %526 = vmatprep.subr.mxu0 0.0
        %527 = vmatpush1.msra.mxu0 0.0
        %528 = vmatprep.subr.mxu0 0.0
        %529 = vmatpush1.msra.mxu0 0.0
        %530 = vmatprep.subr.mxu0 0.0
        %531 = vmatpush1.msra.mxu0 0.0
        %532 = vmatprep.subr.mxu0 0.0
        %533 = vmatpush1.msra.mxu0 0.0
        %534 = vmatprep.subr.mxu0 0.0
        %535 = vmatpush1.msra.mxu0 0.0
        %536 = vmatprep.subr.mxu0 0.0
        %537 = vmatpush1.msra.mxu0 0.0
        %538 = vmatprep.subr.mxu0 0.0
        %539 = vmatpush1.msra.mxu0 0.0
        %540 = vmatprep.subr.mxu0 0.0
        %541 = vmatpush1.msra.mxu0 0.0
        %542 = vmatprep.subr.mxu0 0.0
        %543 = vmatpush1.msra.mxu0 0.0
        %544 = vmatprep.subr.mxu0 0.0
        %545 = vmatpush1.msra.mxu0 0.0
        %546 = vmatprep.subr.mxu0 0.0
        %547 = vmatpush1.msra.mxu0 0.0
        %548 = vmatprep.mubr.f32.mxu0 0.0
        %549 = vmatmul.mubr.f32.gmra.mrb[0].mxu0 %v482
        %v550 = vpop.f32.mrb[0].mxu0
        %v551 = vadd.f32 0.0, %v550
        %v552 = vpop.f32.mrb[0].mxu0
        %553 = vdwg.mxu0
        %v554 = vadd.f32 %v479, %v551
        %555 = vst.msk [vmem:[#allocation4] sm:$0xff] %vm369, %v554
        %556 = vst.msk [vmem:[#allocation2] sm:$0xff] %vm469, %v451
        // Predicated region
        $region57: #{tpu_custom_call.1} parent=35 // pred_check
          %p557 = pneg %p357
        $region58: #{tpu_custom_call.1} parent=35 // pred_check_branch
          %559 = sbr.rel (%p557) target = $region60
        $region59: #{tpu_custom_call.1} parent=35 // pred_region
          %v560 = vld [vmem:[#allocation4] sm:$0xff]
          %v561 = vld [vmem:[#allocation3] sm:$0xff]
          %563 = vset.pattern.permute.xlu0 0
          %564 = vperm.xlu0 %563, %v561
          %v565 = vpop.permute.xlu0 %564
          %v567 = vrcp.pop %v565
          %v568 = vmul.f32 %v560, %v567
          %569 = vst.msk [vmem:[%s356] sm:$0xff] %vm369, %v568
        $region60: #{tpu_custom_call.1} parent=35 // pred_fallthru
          _
        %s570 = sand.u32 %s170, 1
        %s571 = scalar_lea.sflag [#allocation7], %s570
        %s572 = sand.u32 %s170, 1
        %s573 = smul.addr %s572, 8
        %s574 = scalar_lea.vmem [#allocation13], %s573
        // Predicated region
        $region61: #{tpu_custom_call.1} parent=35 // pred_check
          %p575 = pneg %p180
        $region62: #{tpu_custom_call.1} parent=35 // pred_check_branch
          %577 = sbr.rel (%p575) target = $region64
        $region63: #{tpu_custom_call.1} parent=35 // pred_region
          %s579 = ssub.s32 128, 128
          %580 = vsyncadd %s571, %s579
          %s581 = sadd.s32 %s33, %s32
          %s582 = smul.addr %s581, 128
          %s583 = scalar_lea.hbm %s4, %s582
          %s585 = sshll.u32 %s574, 4
          %s586 = int_to_ptr.vmem [resolvable:$true] %s585
          %588 = dma.vmem_to_hbm [thread:$0]  %s586, 128, %s583, %s571
        $region64: #{tpu_custom_call.1} parent=35 // pred_fallthru
          _
      $region36: #{tpu_custom_call.1} parent=5 // pred_fallthru
        _
      %p589 = scmp.le.s32.totalorder 2, %s22
      // Predicated region
      $region65: #{tpu_custom_call.1} parent=5 // pred_check
        %p590 = pneg %p589
      $region66: #{tpu_custom_call.1} parent=5 // pred_check_branch
        %592 = sbr.rel (%p590) target = $region68
      $region67: #{tpu_custom_call.1} parent=5 // pred_region
        %s593 = ssub.s32 %s22, 2
        // Predicated region
        $region69: #{tpu_custom_call.1} parent=67 // pred_check
          %p594 = pneg %p186
        $region70: #{tpu_custom_call.1} parent=67 // pred_check_branch
          %596 = sbr.rel (%p594) target = $region72
        $region71: #{tpu_custom_call.1} parent=67 // pred_region
          %s597 = sand.u32 %s171, 1
          %s598 = scalar_lea.sflag [#allocation7], %s597
          %s599 = sand.u32 %s171, 1
          %s600 = smul.addr %s599, 8
          %s601 = scalar_lea.vmem [#allocation13], %s600
          %602 = dma.done %s598, 128
        $region72: #{tpu_custom_call.1} parent=67 // pred_fallthru
          _
      $region68: #{tpu_custom_call.1} parent=5 // pred_fallthru
        _
    $region6: #{tpu_custom_call.1} parent=1 // loop_footer
      %s26 = sadd.s32 1, %s22
    $region7: #{tpu_custom_call.1} parent=1 // loop_footer_branch
      %21 = sbr.rel target = $region3
    $region8: #{tpu_custom_call.1} parent=1 // loop_exit
      _
    %603 = vsyncpa [#allocation6], 1
    %s604 = scalar_lea.sflag [#allocation6], 1
    %605 = vsyncpa %s604, 1
    %606 = vsyncpa [#allocation9], 1
    %s607 = scalar_lea.sflag [#allocation9], 1
    %608 = vsyncpa %s607, 1
    %609 = vsyncpa [#allocation12], 1
    %s610 = scalar_lea.sflag [#allocation12], 1
    %611 = vsyncpa %s610, 1
    %612 = vsyncpa [#allocation7], 1
    %s613 = scalar_lea.sflag [#allocation7], 1
    %614 = vsyncpa %s613, 1

</llo_original>
